<compile_context>
chip_gen: v7x
topology: tpu7x:2x2x1
jax: 0.10.0
libtpu: 0.0.40
codegen_flags: <defaults>
</compile_context>

<pallas_src>
import functools

import jax
import jax.numpy as jnp
from jax import image as jimage
from jax.experimental import pallas as pl
from jax.experimental.pallas import tpu as pltpu

_LANES = 128
_ACC_COLS_MAX = 8 * _LANES               # accumulator width: 8 vregs -> 8 independent chains
_MAX_CHUNKS = 128                        # cap on fold-chain depth per grid step
_VMEM_INPUT_BUDGET = 16 * 1024 * 1024    # double-buffered input tiles (safe on v5e/v6e/v7x)
_TARGET_BLOCK_BYTES = 1 * 1024 * 1024    # aim for ~1 MiB of input DMA per grid step


def _round_up(x, m):
    return ((x + m - 1) // m) * m


def reverse_normalize(x, H, W):
    # TODO(synk): the real reverse_normalize() from CFIRSTNET2 is defined outside the
    # provided module (the mean/std passed to __init__ are not even stored); we reproduce
    # its shape contract (bring the prediction to the target's HxW) and leave value
    # un-normalization as identity.
    if x.shape[-2:] != (H, W):
        x = jimage.resize(x, x.shape[:-2] + (H, W), method="bilinear")
    return x


def _mse_partial_kernel(x_ref, t_ref, o_ref, *, n_valid, mask_cols):
    """One grid step = (batch tile ib, column-outer jo, column-inner ji).

    x_ref, t_ref : (TB, TN) native-dtype VMEM tiles of the flattened (B, N) inputs.
    o_ref        : (1, TB, ACC) f32 accumulator block, resident across the inner
                   column axis; holds per-sample squared-error partial sums.
    """
    jo = pl.program_id(1)
    ji = pl.program_id(2)
    j = jo * pl.num_programs(2) + ji          # global column-tile index

    @pl.when(ji == 0)
    def _init():
        o_ref[...] = jnp.zeros_like(o_ref)

    tb, tn = x_ref.shape
    acc_cols = o_ref.shape[-1]
    n_full = tn // acc_cols                   # >= 1 by construction
    rem = tn - n_full * acc_cols

    # Hoisted per-step iota (reused by every chunk).
    col_local = jax.lax.broadcasted_iota(jnp.int32, (tb, acc_cols), 1)
    col_base = j * tn                         # first global column of this block

    def chunk_sq(start):
        # Stream one lane-aligned (TB, ACC) chunk straight from the VMEM block:
        # no full-block intermediates, everything stays a few vregs deep.
        xs = x_ref[:, start:start + acc_cols].astype(jnp.float32)
        ts = t_ref[:, start:start + acc_cols].astype(jnp.float32)
        d = xs - ts
        sq = d * d
        if mask_cols:
            # Zero out Pallas-padded garbage columns of the last partial block.
            sq = jnp.where(col_local + (col_base + start) < n_valid, sq, 0.0)
        return sq

    partial = chunk_sq(0)
    for k in range(1, n_full):
        partial = partial + chunk_sq(k * acc_cols)

    if rem:
        # Ragged block width (only happens for a single full-width column block,
        # where there is no Pallas padding): re-read the last ACC-wide window
        # (overlapping the previous chunk) and keep only the trailing `rem`
        # not-yet-counted columns.
        start = tn - acc_cols
        xs = x_ref[:, start:tn].astype(jnp.float32)
        ts = t_ref[:, start:tn].astype(jnp.float32)
        d = xs - ts
        sq = d * d
        sq = jnp.where(col_local >= (acc_cols - rem), sq, 0.0)
        partial = partial + sq

    o_ref[...] += partial[None]


@functools.partial(jax.jit, static_argnames=("reduction", "block_cols"))
def mse_loss(inputs, targets, reduction="mean", block_cols=None):
    """Pallas implementation of MSELoss.forward (NCHW, batch-looped semantics)."""
    H, W = targets.shape[-2:]
    inputs = reverse_normalize(inputs, H=H, W=W)

    B = int(targets.shape[0])
    n_elem = 1
    for s in targets.shape[1:]:
        n_elem *= int(s)

    # Free (bitcast) reshapes only: no jnp.pad / slice copies of the inputs in HBM,
    # and no wrapper-side dtype cast (the kernel casts to f32 per chunk).
    x2 = inputs.reshape(B, n_elem)
    t2 = targets.reshape(B, n_elem)

    bpe = x2.dtype.itemsize + t2.dtype.itemsize   # bytes/element across both inputs

    # ---- tile selection (VMEM-aware, generation-agnostic) --------------------
    acc_max = _ACC_COLS_MAX
    tb0 = B if B <= 8 else 8

    tn_cap = _VMEM_INPUT_BUDGET // (2 * tb0 * bpe)      # 2x: double buffering
    tn_cap = min(tn_cap, _MAX_CHUNKS * acc_max)
    if block_cols is not None:
        tn_cap = min(tn_cap, max(1, int(block_cols)))

    if tn_cap >= n_elem:
        tn = n_elem                                     # single full-width column block
    else:
        tn = max(acc_max, (tn_cap // acc_max) * acc_max)  # multiple of 1024 (and of 128)
        if tn >= n_elem:
            tn = n_elem
    acc_cols = min(acc_max, tn)

    tb = tb0
    if B > 8:
        row_bytes = tn * bpe
        tb_want = _round_up(max(1, _TARGET_BLOCK_BYTES // row_bytes), 8)
        tb_vmem = max(8, ((_VMEM_INPUT_BUDGET // (2 * row_bytes)) // 8) * 8)
        tb = min(tb_want, tb_vmem)
        tb = B if tb >= B else max(8, (tb // 8) * 8)

    gb = pl.cdiv(B, tb)
    total_j = pl.cdiv(n_elem, tn)
    # v7x: feed both TensorCores even when the batch grid is 1/odd by splitting the
    # column axis into (outer "parallel", inner "arbitrary") partial-slab halves.
    n_outer = 2 if (gb % 2 == 1 and total_j % 2 == 0) else 1
    n_inner = total_j // n_outer

    mask_cols = (n_elem % tn) != 0

    vmem_bytes = (2 * tb * tn * bpe            # double-buffered input tiles
                  + 2 * tb * acc_cols * 4      # accumulator block
                  + (2 << 20))                 # headroom for internal scratch
    vmem_limit = int(min(max(vmem_bytes, 4 << 20), 32 << 20))

    kernel = functools.partial(_mse_partial_kernel,
                               n_valid=n_elem, mask_cols=mask_cols)

    partials = pl.pallas_call(
        kernel,
        out_shape=jax.ShapeDtypeStruct((n_outer, B, acc_cols), jnp.float32),
        grid_spec=pltpu.PrefetchScalarGridSpec(
            num_scalar_prefetch=0,
            grid=(gb, n_outer, n_inner),
            in_specs=[
                pl.BlockSpec((tb, tn), lambda ib, jo, ji: (ib, jo * n_inner + ji)),
                pl.BlockSpec((tb, tn), lambda ib, jo, ji: (ib, jo * n_inner + ji)),
            ],
            out_specs=pl.BlockSpec((1, tb, acc_cols), lambda ib, jo, ji: (jo, ib, 0)),
        ),
        compiler_params=pltpu.CompilerParams(
            dimension_semantics=("parallel", "parallel", "arbitrary"),
            vmem_limit_bytes=vmem_limit,
        ),
    )(x2, t2)

    # Tiny finalize on n_outer*B*ACC floats: cross-lane/outer reduce + 1/N scale.
    per_sample = partials.sum(axis=(0, 2)) * jnp.float32(1.0 / float(n_elem))

    if reduction == "mean":
        return per_sample.mean()
    elif reduction == "sum":
        return per_sample.sum()
    elif reduction == "none":
        return per_sample
    else:
        raise ValueError(f"Unknown reduction: {reduction}")


def _ref_loss(inputs, targets, reduction="mean"):
    """Pure-JAX reference (mirrors the PyTorch per-sample loop semantics)."""
    H, W = targets.shape[-2:]
    x = reverse_normalize(inputs, H=H, W=W).astype(jnp.float32)
    t = targets.astype(jnp.float32)
    per = jnp.mean((x - t) ** 2, axis=tuple(range(1, targets.ndim)))
    if reduction == "mean":
        return per.mean()
    elif reduction == "sum":
        return per.sum()
    return per


if __name__ == "__main__":
    key = jax.random.PRNGKey(0)
    keys = jax.random.split(key, 8)

    failures = []

    def _check(tag, x, t, tol, block_cols=None):
        for reduction in ("mean", "sum", "none"):
            out = jax.block_until_ready(
                mse_loss(x, t, reduction=reduction, block_cols=block_cols))
            ref = jax.block_until_ready(_ref_loss(x, t, reduction=reduction))
            if not jnp.allclose(out, ref, rtol=tol, atol=tol):
                failures.append(f"{tag} ({reduction}): {out} vs {ref}")

    # Case 1: module-scale shapes, f32, N = 1024 (single block, no masking).
    x1 = jax.random.normal(keys[0], (2, 4, 16, 16), dtype=jnp.float32)
    t1 = jax.random.normal(keys[1], (2, 4, 16, 16), dtype=jnp.float32)
    _check("case1", x1, t1, 1e-5)

    # Case 2: ragged N = 4884 (remainder-chunk path), bf16 prediction
    # (native-dtype DMA + in-kernel cast), f32 target.
    x2 = jax.random.normal(keys[2], (2, 4, 33, 37), dtype=jnp.float32).astype(jnp.bfloat16)
    t2 = jax.random.normal(keys[3], (2, 4, 33, 37), dtype=jnp.float32)
    _check("case2", x2, t2, 1e-4)

    # Case 3: B=1, N=8192, forced small column tile -> multi-step accumulation and
    # the dual-TensorCore column split (n_outer=2).
    x3 = jax.random.normal(keys[4], (1, 8, 32, 32), dtype=jnp.float32)
    t3 = jax.random.normal(keys[5], (1, 8, 32, 32), dtype=jnp.float32)
    _check("case3", x3, t3, 1e-5, block_cols=1024)

    # Case 4: B=12 > 8 (batch tiling with a partial last batch block, dropped rows),
    # plus a ragged multi-tile column axis with in-kernel masking.
    x4 = jax.random.normal(keys[6], (12, 1, 33, 37), dtype=jnp.float32)
    t4 = jax.random.normal(keys[7], (12, 1, 33, 37), dtype=jnp.float32)
    _check("case4", x4, t4, 1e-5, block_cols=1024)

    if failures:
        for f in failures:
            print("MISMATCH " + f)
    else:
        print("KERNEL_OK")
</pallas_src>

<mosaic_0001>
module attributes {stable_mosaic.version = 11 : i64} {
  func.func @_mse_partial_kernel(%arg0: i32, %arg1: i32, %arg2: i32, %arg3: memref<2x1024xf32, #tpu.memory_space<vmem>>, %arg4: memref<2x1024xf32, #tpu.memory_space<vmem>>, %arg5: memref<1x2x1024xf32, #tpu.memory_space<vmem>>) attributes {dimension_semantics = [#tpu.dimension_semantics<parallel>, #tpu.dimension_semantics<parallel>, #tpu.dimension_semantics<arbitrary>], iteration_bounds = array<i64: 1, 1, 1>, scalar_prefetch = 0 : i64, scratch_operands = 0 : i64, tpu.core_type = #tpu.core_type<tc>, window_params = [{transform_indices = @transform_0, window_bounds = array<i64: 2, 1024>}, {transform_indices = @transform_1, window_bounds = array<i64: 2, 1024>}, {transform_indices = @transform_2, window_bounds = array<i64: 1, 2, 1024>}]} {
    %c0_i32 = arith.constant 0 : i32
    %0 = arith.cmpi eq, %arg2, %c0_i32 : i32
    %1 = arith.extui %0 : i1 to i32
    %c0_i32_0 = arith.constant 0 : i32
    %2 = arith.cmpi ne, %1, %c0_i32_0 : i32
    scf.if %2 {
      %cst = arith.constant 0.000000e+00 : f32
      %11 = vector.broadcast %cst : f32 to vector<1x2x1024xf32>
      %c0_10 = arith.constant 0 : index
      %c0_11 = arith.constant 0 : index
      %c0_12 = arith.constant 0 : index
      %12 = vector.load %arg5[%c0_10, %c0_11, %c0_12] : memref<1x2x1024xf32, #tpu.memory_space<vmem>>, vector<1x2x1024xf32>
      tpu.vector_store %arg5[%c0_10, %c0_11, %c0_12], %11 {strides = array<i32>} : memref<1x2x1024xf32, #tpu.memory_space<vmem>>, vector<1x2x1024xf32>,
    } else {
    }
    %c0 = arith.constant 0 : index
    %c0_1 = arith.constant 0 : index
    %3 = vector.load %arg3[%c0, %c0_1] : memref<2x1024xf32, #tpu.memory_space<vmem>>, vector<2x1024xf32>
    %c0_2 = arith.constant 0 : index
    %c0_3 = arith.constant 0 : index
    %4 = vector.load %arg4[%c0_2, %c0_3] : memref<2x1024xf32, #tpu.memory_space<vmem>>, vector<2x1024xf32>
    %5 = arith.subf %3, %4 : vector<2x1024xf32>
    %6 = arith.mulf %5, %5 : vector<2x1024xf32>
    %c0_4 = arith.constant 0 : index
    %c0_5 = arith.constant 0 : index
    %c0_6 = arith.constant 0 : index
    %7 = vector.load %arg5[%c0_4, %c0_5, %c0_6] : memref<1x2x1024xf32, #tpu.memory_space<vmem>>, vector<1x2x1024xf32>
    %8 = vector.shape_cast %6 : vector<2x1024xf32> to vector<1x2x1024xf32>
    %9 = arith.addf %7, %8 : vector<1x2x1024xf32>
    %c0_7 = arith.constant 0 : index
    %c0_8 = arith.constant 0 : index
    %c0_9 = arith.constant 0 : index
    %10 = vector.load %arg5[%c0_7, %c0_8, %c0_9] : memref<1x2x1024xf32, #tpu.memory_space<vmem>>, vector<1x2x1024xf32>
    tpu.vector_store %arg5[%c0_7, %c0_8, %c0_9], %9 {strides = array<i32>} : memref<1x2x1024xf32, #tpu.memory_space<vmem>>, vector<1x2x1024xf32>,
    return
  }
  func.func @transform_0(%arg0: i32, %arg1: i32, %arg2: i32) -> (i32, i32) {
    %c1_i32 = arith.constant 1 : i32
    %0 = arith.muli %arg1, %c1_i32 : i32
    %1 = arith.addi %0, %arg2 : i32
    %c0_i32 = arith.constant 0 : i32
    return %arg0, %1 : i32, i32
  }
  func.func @transform_1(%arg0: i32, %arg1: i32, %arg2: i32) -> (i32, i32) {
    %c1_i32 = arith.constant 1 : i32
    %0 = arith.muli %arg1, %c1_i32 : i32
    %1 = arith.addi %0, %arg2 : i32
    %c0_i32 = arith.constant 0 : i32
    return %arg0, %1 : i32, i32
  }
  func.func @transform_2(%arg0: i32, %arg1: i32, %arg2: i32) -> (i32, i32, i32) {
    %c0_i32 = arith.constant 0 : i32
    %c0_i32_0 = arith.constant 0 : i32
    return %arg1, %arg0, %c0_i32 : i32, i32, i32
  }
}

</mosaic_0001>

<llo_original>
// kernel: mse_loss.1
$region0: #{mse_loss.1}
  #allocation0 [shape = 'u32[]', space=smem, size = 0x4, offset = 0x4, fixed_abs, tag = 'smem constant byte address 0x4 - core index']
  #allocation1 [shape = 'u32[144,128]{1,0:T(1,128)}', space=vmem, size = 0x12000, scoped, tag = 'internal scratch']
  %s0 = inlined_call_operand.vmem [shape: f32[2,1024], index: 0, kind: input, shape index: {}]
  %s1 = inlined_call_operand.vmem [shape: f32[2,1024], index: 1, kind: input, shape index: {}]
  %s2 = inlined_call_operand.vmem [shape: f32[1,2,1024], index: 2, kind: output, shape index: {}]
  %s3 = sld [smem:[#allocation0]]
  $region22: #{mse_loss.1} parent=0
    _
  %s5 = ssub.s32 1, %s3
  %s6 = scalar_select 0, %s5, %s3
  // Predicated region
  $region2: #{mse_loss.1} parent=0 // pred_check
    _
  $region3: #{mse_loss.1} parent=0 // pred_check_branch
    %8 = sbr.rel (0) target = $region5
  $region4: #{mse_loss.1} parent=0 // pred_region
    %s9 = sadd.s32 0, 0
    %s10 = smul.u32 8, %s9
    %p11 = scmp.lt.s32.totalorder %s10, 7
    %s12 = scalar_select %p11, %s10, 7
    %s13 = smul.addr %s12, 2
    %s14 = scalar_lea.vmem %s0, %s13
    %s15 = sadd.s32 0, 0
    %s16 = smul.u32 8, %s15
  $region5: #{mse_loss.1} parent=0 // pred_fallthru
    _
  // Predicated region
  $region6: #{mse_loss.1} parent=0 // pred_check
    _
  $region7: #{mse_loss.1} parent=0 // pred_check_branch
    %18 = sbr.rel (0) target = $region9
  $region8: #{mse_loss.1} parent=0 // pred_region
    %s19 = sadd.s32 0, 0
    %s20 = smul.u32 8, %s19
    %p21 = scmp.lt.s32.totalorder %s20, 7
    %s22 = scalar_select %p21, %s20, 7
    %s23 = smul.addr %s22, 2
    %s24 = scalar_lea.vmem %s1, %s23
    %s25 = sadd.s32 0, 0
    %s26 = smul.u32 8, %s25
  $region9: #{mse_loss.1} parent=0 // pred_fallthru
    _
  %s27 = sadd.s32 0, 0
  %s28 = smul.u32 8, %s27
  %p29 = scmp.lt.s32.totalorder %s28, 7
  %s30 = scalar_select %p29, %s28, 7
  %s31 = smul.addr %s30, 2
  %s32 = scalar_lea.vmem %s0, %s31
  %s33 = sadd.s32 0, 0
  %s34 = smul.u32 8, %s33
  %p35 = scmp.lt.s32.totalorder %s34, 7
  %s36 = scalar_select %p35, %s34, 7
  %s37 = smul.addr %s36, 2
  %s38 = scalar_lea.vmem %s1, %s37
  %s39 = sadd.s32 0, 0
  %s40 = smul.u32 8, %s39
  %p41 = scmp.lt.s32.totalorder %s40, 7
  %s42 = scalar_select %p41, %s40, 7
  %s43 = smul.addr %s42, 2
  %s44 = scalar_lea.vmem %s0, %s43
  %s45 = sadd.s32 0, 0
  %s46 = smul.u32 8, %s45
  %s47 = sadd.s32 0, 0
  %s48 = smul.u32 8, %s47
  %p49 = scmp.lt.s32.totalorder %s48, 7
  %s50 = scalar_select %p49, %s48, 7
  %s51 = smul.addr %s50, 2
  %s52 = scalar_lea.vmem %s1, %s51
  %s53 = sadd.s32 0, 0
  %s54 = smul.u32 8, %s53
  %p55 = scmp.eq.s32.totalorder 0, 0
  // Predicated region
  $region10: #{mse_loss.1} parent=0 // pred_check
    %p56 = pneg %p55
  $region11: #{mse_loss.1} parent=0 // pred_check_branch
    %58 = sbr.rel (%p56) target = $region13
  $region12: #{mse_loss.1} parent=0 // pred_region
    %59 = vst [vmem:[%s2] sm:$0xff] 0.0
    %60 = vst [vmem:[%s2 + $0x8] sm:$0xff] 0.0
  $region13: #{mse_loss.1} parent=0 // pred_fallthru
    _
  %v61 = vld [vmem:[%s44] sm:$0xff]
  %v62 = vld [vmem:[%s44 + $0x8] sm:$0xff]
  %v63 = vld [vmem:[%s52] sm:$0xff]
  %v64 = vld [vmem:[%s52 + $0x8] sm:$0xff]
  %v65 = vsub.f32 %v61, %v63
  %v66 = vsub.f32 %v62, %v64
  %v67 = vmul.f32 %v65, %v65
  %v68 = vmul.f32 %v66, %v66
  %v69 = vld [vmem:[%s2] sm:$0xff]
  %v70 = vld [vmem:[%s2 + $0x8] sm:$0xff]
  %v71 = vadd.f32 %v69, %v67
  %v72 = vadd.f32 %v70, %v68
  %73 = vst [vmem:[%s2] sm:$0xff] %v71
  %74 = vst [vmem:[%s2 + $0x8] sm:$0xff] %v72
  // Predicated region
  $region14: #{mse_loss.1} parent=0 // pred_check
    _
  $region15: #{mse_loss.1} parent=0 // pred_check_branch
    %76 = sbr.rel (0) target = $region17
  $region16: #{mse_loss.1} parent=0 // pred_region
    _
  $region17: #{mse_loss.1} parent=0 // pred_fallthru
    _
  // Predicated region
  $region18: #{mse_loss.1} parent=0 // pred_check
    _
  $region19: #{mse_loss.1} parent=0 // pred_check_branch
    %78 = sbr.rel (0) target = $region21
  $region20: #{mse_loss.1} parent=0 // pred_region
    _
  $region21: #{mse_loss.1} parent=0 // pred_fallthru
    _

</llo_original>
